<compile_context>
chip_gen: v6e
topology: v6e:2x2x1
jax: 0.10.0
libtpu: 0.0.40
codegen_flags: <defaults>
</compile_context>

<pallas_src>
import functools

import jax
import jax.numpy as jnp
from jax.experimental import pallas as pl
from jax.experimental.pallas import tpu as pltpu


def _round_up(n, m):
    return ((n + m - 1) // m) * m


def _pad_to(a, shape):
    return jnp.pad(a, [(0, s - d) for d, s in zip(a.shape, shape)])


def _vmem_limit(bytes_needed):
    # 2x headroom for pipelining bookkeeping, clamped into [16 MiB, 64 MiB] so
    # the same value is valid on v5e/v6e (128 MiB physical) and v7x (64 MiB).
    return int(min(64 << 20, max(16 << 20, 2 * bytes_needed + (2 << 20))))


# ----------------------------------------------------------------------------
# Phase 1: pre = x @ Wi + (bi + bh), all timesteps batched over rows (parallel)
# ----------------------------------------------------------------------------
def _xw_bias_kernel(x_ref, w_ref, b_ref, o_ref):
    o_ref[...] = (
        jnp.dot(x_ref[...], w_ref[...], preferred_element_type=jnp.float32)
        + b_ref[...]
    ).astype(o_ref.dtype)


def _i2h_all_steps(x_rows, wi_p, b_p, tm):
    Mp, Ip = x_rows.shape
    Hp = wi_p.shape[1]
    bytes_needed = (wi_p.size * wi_p.dtype.itemsize + b_p.size * 4
                    + 2 * tm * Ip * x_rows.dtype.itemsize + 2 * tm * Hp * 4)
    return pl.pallas_call(
        _xw_bias_kernel,
        out_shape=jax.ShapeDtypeStruct((Mp, Hp), jnp.float32),
        grid_spec=pltpu.PrefetchScalarGridSpec(
            num_scalar_prefetch=0,
            grid=(Mp // tm,),
            in_specs=[
                pl.BlockSpec((tm, Ip), lambda i: (i, 0)),   # x rows
                pl.BlockSpec((Ip, Hp), lambda i: (0, 0)),   # Wi (resident)
                pl.BlockSpec((1, Hp), lambda i: (0, 0)),    # bi + bh
            ],
            out_specs=pl.BlockSpec((tm, Hp), lambda i: (i, 0)),
        ),
        compiler_params=pltpu.CompilerParams(
            dimension_semantics=("parallel",),
            vmem_limit_bytes=_vmem_limit(bytes_needed)),
    )(x_rows, wi_p, b_p)


# ----------------------------------------------------------------------------
# Phase 2: the recurrence h_t = tanh(pre_t + h_{t-1} @ Wh)  (sequential)
# ----------------------------------------------------------------------------
def _recurrence_kernel(pre_ref, h0_ref, wh_ref, hall_ref, hfin_ref, h_scr,
                       *, seq_len, tb, matmul_dtype):
    blk = pl.program_id(0)

    @pl.when(blk == 0)
    def _init():
        h_scr[...] = h0_ref[...].astype(jnp.float32)

    def body(i, carry):
        h = h_scr[...]                               # (Bp, Hp) f32
        pre = pre_ref[i] + jnp.dot(h.astype(matmul_dtype), wh_ref[...],
                                   preferred_element_type=jnp.float32)
        h_new = jnp.tanh(pre)                        # f32 elementwise (v5e-safe)
        # Only advance the carried state for real (non-padded) timesteps so the
        # final hidden equals the state after exactly seq_len steps.
        t_global = blk * tb + i
        h_scr[...] = jnp.where(t_global < seq_len, h_new, h)
        hall_ref[i] = h_new.astype(hall_ref.dtype)
        return carry

    # TB timesteps per grid step; fully unrolled for LLO scheduler visibility.
    jax.lax.fori_loop(0, tb, body, 0, unroll=True)

    @pl.when(blk == pl.num_programs(0) - 1)
    def _finalize():
        hfin_ref[...] = h_scr[...].astype(hfin_ref.dtype)


def _recurrence(pre_p, h0_p, wh_p, tb, seq_len, matmul_dtype):
    Tp, Bp, Hp = pre_p.shape
    db = jnp.dtype(matmul_dtype).itemsize
    bytes_needed = (wh_p.size * wh_p.dtype.itemsize
                    + 3 * Bp * Hp * 4                 # h0 + h_final + scratch
                    + 2 * tb * Bp * Hp * 4            # pre block (double buffered)
                    + 2 * tb * Bp * Hp * db)          # h_all block (double buffered)
    kernel = functools.partial(_recurrence_kernel, seq_len=seq_len, tb=tb,
                               matmul_dtype=matmul_dtype)
    return pl.pallas_call(
        kernel,
        out_shape=(jax.ShapeDtypeStruct((Tp, Bp, Hp), matmul_dtype),
                   jax.ShapeDtypeStruct((Bp, Hp), jnp.float32)),
        grid_spec=pltpu.PrefetchScalarGridSpec(
            num_scalar_prefetch=0,
            grid=(Tp // tb,),
            in_specs=[
                pl.BlockSpec((tb, Bp, Hp), lambda b: (b, 0, 0)),  # pre block
                pl.BlockSpec((Bp, Hp), lambda b: (0, 0)),         # h0 (read once)
                pl.BlockSpec((Hp, Hp), lambda b: (0, 0)),         # Wh (resident)
            ],
            out_specs=[
                pl.BlockSpec((tb, Bp, Hp), lambda b: (b, 0, 0)),  # h_t for all t
                pl.BlockSpec((Bp, Hp), lambda b: (0, 0)),         # final hidden
            ],
            scratch_shapes=[pltpu.VMEM((Bp, Hp), jnp.float32)],   # carried hidden
        ),
        compiler_params=pltpu.CompilerParams(
            dimension_semantics=("arbitrary",),   # true recurrence: sequential
            vmem_limit_bytes=_vmem_limit(bytes_needed)),
    )(pre_p, h0_p, wh_p)


# ----------------------------------------------------------------------------
# Phase 3: log_softmax(h @ Wo + bo), batched over all timesteps (parallel)
# ----------------------------------------------------------------------------
def _h2o_logsoftmax_kernel(h_ref, wo_ref, bo_ref, o_ref):
    # bo already holds -1e30 in padded output lanes (mask baked into the bias;
    # padded Wo columns are zero), so no iota/compare/select is needed here.
    logits = (jnp.dot(h_ref[...], wo_ref[...], preferred_element_type=jnp.float32)
              + bo_ref[...])
    m = jnp.max(logits, axis=-1, keepdims=True)
    shifted = logits - m
    lse = jnp.log(jnp.sum(jnp.exp(shifted), axis=-1, keepdims=True))
    o_ref[...] = (shifted - lse).astype(o_ref.dtype)


def _h2o_logsoftmax(h_rows, wo_p, bo_p, tm):
    Mp, Hp = h_rows.shape
    Op = wo_p.shape[1]
    bytes_needed = (wo_p.size * wo_p.dtype.itemsize + bo_p.size * 4
                    + 2 * tm * Hp * h_rows.dtype.itemsize + 2 * tm * Op * 4)
    return pl.pallas_call(
        _h2o_logsoftmax_kernel,
        out_shape=jax.ShapeDtypeStruct((Mp, Op), jnp.float32),
        grid_spec=pltpu.PrefetchScalarGridSpec(
            num_scalar_prefetch=0,
            grid=(Mp // tm,),
            in_specs=[
                pl.BlockSpec((tm, Hp), lambda i: (i, 0)),   # hidden rows
                pl.BlockSpec((Hp, Op), lambda i: (0, 0)),   # Wo (resident)
                pl.BlockSpec((1, Op), lambda i: (0, 0)),    # bo (+ lane mask)
            ],
            out_specs=pl.BlockSpec((tm, Op), lambda i: (i, 0)),
        ),
        compiler_params=pltpu.CompilerParams(
            dimension_semantics=("parallel",),
            vmem_limit_bytes=_vmem_limit(bytes_needed)),
    )(h_rows, wo_p, bo_p)


# ----------------------------------------------------------------------------
# Wrappers
# ----------------------------------------------------------------------------
def rnn_forward_seq(xs, h0, params, *, matmul_dtype=jnp.bfloat16,
                    tb_max=32, tm_max=256):
    """Run the RNN cell over a whole sequence.

    xs: (T, B, input_size), h0: (B, hidden_size).
    Returns (log_probs (T, B, output_size), h_final (B, hidden_size)).
    """
    wi, bi, wh, bh, wo, bo = params
    T, B, input_size = xs.shape
    hidden_size = wh.shape[0]
    output_size = wo.shape[1]

    # Lane/sublane-aligned padded sizes.
    Bp = _round_up(B, 8)
    Ip = _round_up(input_size, 128)
    Hp = _round_up(hidden_size, 128)
    Op = _round_up(output_size, 128)

    tb = min(tb_max, T)                 # timesteps per sequential grid step
    Tp = _round_up(T, tb)

    # Pad + cast once in the wrapper (hoisted out of all loops).
    xs_p = _pad_to(xs, (Tp, Bp, Ip)).astype(matmul_dtype)
    h0_p = _pad_to(h0, (Bp, Hp)).astype(jnp.float32)
    wi_p = _pad_to(wi, (Ip, Hp)).astype(matmul_dtype)
    wh_p = _pad_to(wh, (Hp, Hp)).astype(matmul_dtype)
    wo_p = _pad_to(wo, (Hp, Op)).astype(matmul_dtype)
    b_p = _pad_to((bi + bh).reshape(1, hidden_size), (1, Hp)).astype(jnp.float32)
    # Output-lane mask baked into the bias (padded Wo columns stay zero).
    bo_p = jnp.full((1, Op), -1e30, jnp.float32)
    bo_p = bo_p.at[:, :output_size].set(bo.reshape(1, output_size).astype(jnp.float32))

    # ---- Phase 1 (parallel): pre[t] = x_t @ Wi + (bi + bh) -----------------
    M1 = Tp * Bp
    tm1 = min(tm_max, M1)
    M1p = _round_up(M1, tm1)
    x_rows = _pad_to(xs_p.reshape(M1, Ip), (M1p, Ip))
    pre_rows = _i2h_all_steps(x_rows, wi_p, b_p, tm1)
    pre_p = pre_rows[:M1].reshape(Tp, Bp, Hp)

    # ---- Phase 2 (sequential): h_t = tanh(pre_t + h_{t-1} @ Wh) ------------
    hall_p, hfin_p = _recurrence(pre_p, h0_p, wh_p, tb, T, matmul_dtype)

    # ---- Phase 3 (parallel): log_softmax(h_t @ Wo + bo) --------------------
    M3 = T * Bp
    tm3 = min(tm_max, M3)
    M3p = _round_up(M3, tm3)
    h_rows = _pad_to(hall_p[:T].reshape(M3, Hp), (M3p, Hp))
    out_rows = _h2o_logsoftmax(h_rows, wo_p, bo_p, tm3)
    out_p = out_rows[:M3].reshape(T, Bp, Op)

    return out_p[:, :B, :output_size], hfin_p[:B, :hidden_size]


def rnn_forward(x, h, params, *, matmul_dtype=jnp.bfloat16):
    """Single-step forward matching the PyTorch module: returns (output, hidden)."""
    out, h_new = rnn_forward_seq(x[None], h, params, matmul_dtype=matmul_dtype)
    return out[0], h_new


def init_params(key, input_size, hidden_size, output_size):
    """nn.Linear-equivalent params; weights pre-transposed to (in, out)."""
    k = jax.random.split(key, 6)
    wi = jax.random.normal(k[0], (input_size, hidden_size), jnp.float32) * 0.1
    bi = jax.random.normal(k[1], (hidden_size,), jnp.float32) * 0.1
    wh = jax.random.normal(k[2], (hidden_size, hidden_size), jnp.float32) * 0.1
    bh = jax.random.normal(k[3], (hidden_size,), jnp.float32) * 0.1
    wo = jax.random.normal(k[4], (hidden_size, output_size), jnp.float32) * 0.1
    bo = jax.random.normal(k[5], (output_size,), jnp.float32) * 0.1
    return (wi, bi, wh, bh, wo, bo)


# ----------------------------------------------------------------------------
# Pure-JAX references
# ----------------------------------------------------------------------------
def rnn_step_ref(x, h, params):
    wi, bi, wh, bh, wo, bo = params
    h_new = jnp.tanh(x @ wi + bi + h @ wh + bh)
    logits = h_new @ wo + bo
    return jax.nn.log_softmax(logits, axis=1), h_new


def rnn_seq_ref(xs, h0, params):
    def step(h, x):
        out, h_new = rnn_step_ref(x, h, params)
        return h_new, out
    h_final, outs = jax.lax.scan(step, h0, xs)
    return outs, h_final


if __name__ == "__main__":
    batch = 2
    input_size = 16
    hidden_size = 32
    output_size = 8
    seq_len = 8

    key = jax.random.PRNGKey(0)
    kx, kh, kp = jax.random.split(key, 3)

    xs = jax.random.normal(kx, (seq_len, batch, input_size), jnp.float32)
    # PyTorch init_hidden() gives zeros; use a random hidden to exercise h2h.
    h0 = jax.random.normal(kh, (batch, hidden_size), jnp.float32)
    params = init_params(kp, input_size, hidden_size, output_size)

    # --- single step (f32 exactness): semantics of nn.Module.forward --------
    lp, hn = rnn_forward(xs[0], h0, params, matmul_dtype=jnp.float32)
    jax.block_until_ready((lp, hn))
    lp_ref, hn_ref = rnn_step_ref(xs[0], h0, params)
    assert jnp.allclose(lp, lp_ref, atol=1e-5, rtol=1e-5)
    assert jnp.allclose(hn, hn_ref, atol=1e-5, rtol=1e-5)

    # --- full sequence, f32 matmuls (tight check) ----------------------------
    lps, hf = rnn_forward_seq(xs, h0, params, matmul_dtype=jnp.float32)
    jax.block_until_ready((lps, hf))
    lps_ref, hf_ref = rnn_seq_ref(xs, h0, params)
    assert jnp.allclose(lps, lps_ref, atol=1e-5, rtol=1e-5)
    assert jnp.allclose(hf, hf_ref, atol=1e-5, rtol=1e-5)

    # --- full sequence, default bf16 MXU inputs (v5e/v6e/v7x fast path) ------
    lps_bf, hf_bf = rnn_forward_seq(xs, h0, params)
    jax.block_until_ready((lps_bf, hf_bf))
    assert jnp.allclose(lps_bf, lps_ref, atol=5e-2, rtol=5e-2)
    assert jnp.allclose(hf_bf, hf_ref, atol=5e-2, rtol=5e-2)

    print("KERNEL_OK")
</pallas_src>

<mosaic_0001>
module attributes {stable_mosaic.version = 11 : i64} {
  func.func @_xw_bias_kernel(%arg0: i32, %arg1: memref<8x128xf32, #tpu.memory_space<vmem>>, %arg2: memref<128x128xf32, #tpu.memory_space<vmem>>, %arg3: memref<1x128xf32, #tpu.memory_space<vmem>>, %arg4: memref<8x128xf32, #tpu.memory_space<vmem>>) attributes {dimension_semantics = [#tpu.dimension_semantics<parallel>], iteration_bounds = array<i64: 1>, scalar_prefetch = 0 : i64, scratch_operands = 0 : i64, tpu.core_type = #tpu.core_type<tc>, window_params = [{transform_indices = @transform_0, window_bounds = array<i64: 8, 128>}, {pipeline_mode = #tpu.pipeline_mode<synchronous>, transform_indices = @transform_1, window_bounds = array<i64: 128, 128>}, {pipeline_mode = #tpu.pipeline_mode<synchronous>, transform_indices = @transform_2, window_bounds = array<i64: 1, 128>}, {transform_indices = @transform_3, window_bounds = array<i64: 8, 128>}]} {
    %c0 = arith.constant 0 : index
    %c0_0 = arith.constant 0 : index
    %0 = vector.load %arg1[%c0, %c0_0] : memref<8x128xf32, #tpu.memory_space<vmem>>, vector<8x128xf32>
    %c0_1 = arith.constant 0 : index
    %c0_2 = arith.constant 0 : index
    %1 = vector.load %arg2[%c0_1, %c0_2] : memref<128x128xf32, #tpu.memory_space<vmem>>, vector<128x128xf32>
    %cst = arith.constant dense<0.000000e+00> : vector<8x128xf32>
    %2 = tpu.matmul %0, %1, %cst {dimension_numbers = #tpu.dot_dimension_numbers<[1], [0], [0], [1], [0, 0, 1, 1], [], []>} : vector<8x128xf32>, vector<128x128xf32>, vector<8x128xf32> -> vector<8x128xf32>
    %c0_3 = arith.constant 0 : index
    %c0_4 = arith.constant 0 : index
    %3 = vector.load %arg3[%c0_3, %c0_4] : memref<1x128xf32, #tpu.memory_space<vmem>>, vector<1x128xf32>
    %4 = vector.broadcast %3 : vector<1x128xf32> to vector<8x128xf32>
    %5 = arith.addf %2, %4 : vector<8x128xf32>
    %c0_5 = arith.constant 0 : index
    %c0_6 = arith.constant 0 : index
    %6 = vector.load %arg4[%c0_5, %c0_6] : memref<8x128xf32, #tpu.memory_space<vmem>>, vector<8x128xf32>
    tpu.vector_store %arg4[%c0_5, %c0_6], %5 {strides = array<i32>} : memref<8x128xf32, #tpu.memory_space<vmem>>, vector<8x128xf32>,
    return
  }
  func.func @transform_0(%arg0: i32) -> (i32, i32) {
    %c0_i32 = arith.constant 0 : i32
    %c0_i32_0 = arith.constant 0 : i32
    return %arg0, %c0_i32 : i32, i32
  }
  func.func @transform_1(%arg0: i32) -> (i32, i32) {
    %c0_i32 = arith.constant 0 : i32
    %c0_i32_0 = arith.constant 0 : i32
    %c0_i32_1 = arith.constant 0 : i32
    return %c0_i32, %c0_i32_0 : i32, i32
  }
  func.func @transform_2(%arg0: i32) -> (i32, i32) {
    %c0_i32 = arith.constant 0 : i32
    %c0_i32_0 = arith.constant 0 : i32
    %c0_i32_1 = arith.constant 0 : i32
    return %c0_i32, %c0_i32_0 : i32, i32
  }
  func.func @transform_3(%arg0: i32) -> (i32, i32) {
    %c0_i32 = arith.constant 0 : i32
    %c0_i32_0 = arith.constant 0 : i32
    return %arg0, %c0_i32 : i32, i32
  }
}

</mosaic_0001>

<llo_original>
// kernel: tpu_custom_call.1
$region0: #{tpu_custom_call.1}
  #allocation0 [shape = 'u32[]', space=smem, size = 0x4, offset = 0x4, fixed_abs, tag = 'smem constant byte address 0x4 - core index']
  #allocation1 [shape = 'u32[144,128]{1,0:T(1,128)}', space=vmem, size = 0x12000, scoped, tag = 'internal scratch']
  %s0 = inlined_call_operand.hbm [shape: f32[8,128], index: 0, kind: input, shape index: {}]
  %s1 = inlined_call_operand.hbm [shape: f32[128,128], index: 1, kind: input, shape index: {}]
  %s2 = inlined_call_operand.vmem [shape: f32[1,128], index: 2, kind: input, shape index: {}]
  %s3 = inlined_call_operand.hbm [shape: f32[8,128], index: 3, kind: output, shape index: {}]
  %s4 = sld [smem:[#allocation0]]
  $region30: #{tpu_custom_call.1} parent=0
    _
  %s6 = ssub.s32 1, %s4
  %s7 = scalar_select 0, %s6, %s4
  $region1: #{tpu_custom_call.1} parent=0
    #allocation2 [shape = 'u8[4096]{0}', space=vmem, size = 0x1000, scoped, tag = 'input window, operand 0, single buffered']
    #allocation3 [shape = 's32[1]{0}', space=sflag, size = 0x4, scoped, tag = 'scoped memory for tpu_custom_call.1']
    #allocation4 [shape = 's32[1]{0}', space=sflag, size = 0x4, scoped, tag = 'scoped memory for tpu_custom_call.1']
    #allocation5 [shape = 'u8[65536]{0}', space=vmem, size = 0x10000, scoped, tag = 'input window, operand 1, single buffered']
    #allocation6 [shape = 's32[1]{0}', space=sflag, size = 0x4, scoped, tag = 'scoped memory for tpu_custom_call.1']
    #allocation7 [shape = 'u8[4096]{0}', space=vmem, size = 0x1000, scoped, tag = 'output window, operand 0, single buffered']
    %8 = vsyncpa [#allocation3], 0
    %9 = vsyncpa [#allocation6], 0
    %10 = vsyncpa [#allocation4], 0
    // Predicated region
    $region2: #{tpu_custom_call.1} parent=1 // pred_check
      _
    $region3: #{tpu_custom_call.1} parent=1 // pred_check_branch
      %12 = sbr.rel (0) target = $region5
    $region4: #{tpu_custom_call.1} parent=1 // pred_region
      %s14 = ssub.s32 128, 128
      %15 = vsyncadd [#allocation3], %s14
      %s17 = sshll.u32 [#allocation2], 4
      %s18 = int_to_ptr.vmem [resolvable:$true] %s17
      %20 = dma.hbm_to_vmem [thread:$0]  %s0, 128, %s18, [#allocation3]
    $region5: #{tpu_custom_call.1} parent=1 // pred_fallthru
      _
    // Predicated region
    $region6: #{tpu_custom_call.1} parent=1 // pred_check
      _
    $region7: #{tpu_custom_call.1} parent=1 // pred_check_branch
      %22 = sbr.rel (0) target = $region9
    $region8: #{tpu_custom_call.1} parent=1 // pred_region
      %s24 = ssub.s32 2048, 2048
      %25 = vsyncadd [#allocation6], %s24
      %s26 = sshll.u32 [#allocation5], 4
      %s27 = int_to_ptr.vmem [resolvable:$true] %s26
      %32 = dma.hbm_to_vmem [thread:$0]  %s1, 2048, %s27, [#allocation6], 128, 128, 8
    $region9: #{tpu_custom_call.1} parent=1 // pred_fallthru
      _
    // Predicated region
    $region10: #{tpu_custom_call.1} parent=1 // pred_check
      _
    $region11: #{tpu_custom_call.1} parent=1 // pred_check_branch
      %34 = sbr.rel (0) target = $region13
    $region12: #{tpu_custom_call.1} parent=1 // pred_region
      _
    $region13: #{tpu_custom_call.1} parent=1 // pred_fallthru
      _
    // Predicated region
    $region14: #{tpu_custom_call.1} parent=1 // pred_check
      _
    $region15: #{tpu_custom_call.1} parent=1 // pred_check_branch
      %36 = sbr.rel (0) target = $region17
    $region16: #{tpu_custom_call.1} parent=1 // pred_region
      %37 = dma.done [#allocation3], 128
    $region17: #{tpu_custom_call.1} parent=1 // pred_fallthru
      _
    // Predicated region
    $region18: #{tpu_custom_call.1} parent=1 // pred_check
      _
    $region19: #{tpu_custom_call.1} parent=1 // pred_check_branch
      %39 = sbr.rel (0) target = $region21
    $region20: #{tpu_custom_call.1} parent=1 // pred_region
      %40 = dma.done [#allocation6], 2048
    $region21: #{tpu_custom_call.1} parent=1 // pred_fallthru
      _
    %v41 = vld [vmem:[#allocation2] sm:$0xff]
    %v42 = vld [vmem:[#allocation5] sm:$0xff]
    %v43 = vld [vmem:[#allocation5 + $0x8] sm:$0xff]
    %v44 = vld [vmem:[#allocation5 + $0x10] sm:$0xff]
    %v45 = vld [vmem:[#allocation5 + $0x18] sm:$0xff]
    %v46 = vld [vmem:[#allocation5 + $0x20] sm:$0xff]
    %v47 = vld [vmem:[#allocation5 + $0x28] sm:$0xff]
    %v48 = vld [vmem:[#allocation5 + $0x30] sm:$0xff]
    %v49 = vld [vmem:[#allocation5 + $0x38] sm:$0xff]
    %v50 = vld [vmem:[#allocation5 + $0x40] sm:$0xff]
    %v51 = vld [vmem:[#allocation5 + $0x48] sm:$0xff]
    %v52 = vld [vmem:[#allocation5 + $0x50] sm:$0xff]
    %v53 = vld [vmem:[#allocation5 + $0x58] sm:$0xff]
    %v54 = vld [vmem:[#allocation5 + $0x60] sm:$0xff]
    %v55 = vld [vmem:[#allocation5 + $0x68] sm:$0xff]
    %v56 = vld [vmem:[#allocation5 + $0x70] sm:$0xff]
    %v57 = vld [vmem:[#allocation5 + $0x78] sm:$0xff]
    %v58 = vld [vmem:[%s2] sm:$0x1]
    %v60 = vlaneseq
    %v61 = vshrl.u32 %v60, 7
    %v62 = vsub.s32 0, %v61
    %v63 = vrot.slane %v58, %v62
    %65 = vmatprep.subr.mxu0 0.0
    %66 = vmatpush1.msra.mxu0 %v57
    %67 = vmatprep.subr.mxu0 0.0
    %68 = vmatpush1.msra.mxu0 %v56
    %69 = vmatprep.subr.mxu0 0.0
    %70 = vmatpush1.msra.mxu0 %v55
    %71 = vmatprep.subr.mxu0 0.0
    %72 = vmatpush1.msra.mxu0 %v54
    %73 = vmatprep.subr.mxu0 0.0
    %74 = vmatpush1.msra.mxu0 %v53
    %75 = vmatprep.subr.mxu0 0.0
    %76 = vmatpush1.msra.mxu0 %v52
    %77 = vmatprep.subr.mxu0 0.0
    %78 = vmatpush1.msra.mxu0 %v51
    %79 = vmatprep.subr.mxu0 0.0
    %80 = vmatpush1.msra.mxu0 %v50
    %81 = vmatprep.subr.mxu0 0.0
    %82 = vmatpush1.msra.mxu0 %v49
    %83 = vmatprep.subr.mxu0 0.0
    %84 = vmatpush1.msra.mxu0 %v48
    %85 = vmatprep.subr.mxu0 0.0
    %86 = vmatpush1.msra.mxu0 %v47
    %87 = vmatprep.subr.mxu0 0.0
    %88 = vmatpush1.msra.mxu0 %v46
    %89 = vmatprep.subr.mxu0 0.0
    %90 = vmatpush1.msra.mxu0 %v45
    %91 = vmatprep.subr.mxu0 0.0
    %92 = vmatpush1.msra.mxu0 %v44
    %93 = vmatprep.subr.mxu0 0.0
    %94 = vmatpush1.msra.mxu0 %v43
    %95 = vmatprep.subr.mxu0 0.0
    %96 = vmatpush1.msra.mxu0 %v42
    %97 = vmatprep.subr.mxu0 0.0
    %98 = vmatpush2.msra.mxu0 0.0
    %99 = vmatprep.subr.mxu0 0.0
    %100 = vmatpush2.msra.mxu0 0.0
    %101 = vmatprep.subr.mxu0 0.0
    %102 = vmatpush2.msra.mxu0 0.0
    %103 = vmatprep.subr.mxu0 0.0
    %104 = vmatpush2.msra.mxu0 0.0
    %105 = vmatprep.subr.mxu0 0.0
    %106 = vmatpush2.msra.mxu0 0.0
    %107 = vmatprep.subr.mxu0 0.0
    %108 = vmatpush2.msra.mxu0 0.0
    %109 = vmatprep.subr.mxu0 0.0
    %110 = vmatpush2.msra.mxu0 0.0
    %111 = vmatprep.subr.mxu0 0.0
    %112 = vmatpush2.msra.mxu0 0.0
    %113 = vmatprep.subr.mxu0 0.0
    %114 = vmatpush2.msra.mxu0 0.0
    %115 = vmatprep.subr.mxu0 0.0
    %116 = vmatpush2.msra.mxu0 0.0
    %117 = vmatprep.subr.mxu0 0.0
    %118 = vmatpush2.msra.mxu0 0.0
    %119 = vmatprep.subr.mxu0 0.0
    %120 = vmatpush2.msra.mxu0 0.0
    %121 = vmatprep.subr.mxu0 0.0
    %122 = vmatpush2.msra.mxu0 0.0
    %123 = vmatprep.subr.mxu0 0.0
    %124 = vmatpush2.msra.mxu0 0.0
    %125 = vmatprep.subr.mxu0 0.0
    %126 = vmatpush2.msra.mxu0 0.0
    %127 = vmatprep.subr.mxu0 0.0
    %128 = vmatpush2.msra.mxu0 0.0
    %129 = vmatprep.mubr.f32.mxu0 0.0
    %130 = vmatmul.mubr.f32.gmra.mxu0 %v41
    %v131 = vpop.f32.mrf.mxu0
    %v132 = vadd.f32 %v63, %v131
    %v133 = vpop.f32.mrf.mxu0
    %134 = vdwg.mxu0
    %135 = vst [vmem:[#allocation7] sm:$0xff] %v132
    // Predicated region
    $region22: #{tpu_custom_call.1} parent=1 // pred_check
      _
    $region23: #{tpu_custom_call.1} parent=1 // pred_check_branch
      %137 = sbr.rel (0) target = $region25
    $region24: #{tpu_custom_call.1} parent=1 // pred_region
      %s139 = ssub.s32 128, 128
      %140 = vsyncadd [#allocation4], %s139
      %s142 = sshll.u32 [#allocation7], 4
      %s143 = int_to_ptr.vmem [resolvable:$true] %s142
      %145 = dma.vmem_to_hbm [thread:$0]  %s143, 128, %s3, [#allocation4]
    $region25: #{tpu_custom_call.1} parent=1 // pred_fallthru
      _
    // Predicated region
    $region26: #{tpu_custom_call.1} parent=1 // pred_check
      _
    $region27: #{tpu_custom_call.1} parent=1 // pred_check_branch
      %147 = sbr.rel (0) target = $region29
    $region28: #{tpu_custom_call.1} parent=1 // pred_region
      %148 = dma.done [#allocation4], 128
    $region29: #{tpu_custom_call.1} parent=1 // pred_fallthru
      _
    %149 = vsyncpa [#allocation3], 1
    %150 = vsyncpa [#allocation6], 1
    %151 = vsyncpa [#allocation4], 1

</llo_original>
